<compile_context>
chip_gen: v7x
topology: tpu7x:2x2x1
jax: 0.10.0
libtpu: 0.0.40
codegen_flags: <defaults>
</compile_context>

<pallas_src>
import numpy as np
import jax
import jax.numpy as jnp
from jax.experimental import pallas as pl
from jax.experimental.pallas import tpu as pltpu


_ALL_METRICS = ('tpr', 'fpr', 'tnr', 'fnr', 'ppv', 'npv', 'accuracy')
_CORE_SPLITS = 2          # v7x: one half of N per TensorCore; serial on v5e/v6e
_MAX_TILE_N = 8192        # lanes per tile; (G+5)*8K bytes/buffer -> tiny VMEM


def _round_up(x, m):
    return ((x + m - 1) // m) * m


def _make_cm_sums_kernel(threshold):
    def kernel(pred_ref, labels_ref, sens_ref,
               s_sum_ref, sl_sum_ref, sp_sum_ref, slp_sum_ref):
        t = pl.program_id(1)

        p = pred_ref[...]                                   # (1, TILE_N) f32
        if threshold is not None:                           # ThresholdOperator
            p = (p >= threshold).astype(jnp.float32)
        l = labels_ref[...].astype(jnp.float32)             # (1, TILE_N) i8->f32
        s = sens_ref[...].astype(jnp.float32)               # (G, TILE_N) i8->f32

        lp = l * p
        sum_s = jnp.sum(s, axis=1, keepdims=True)           # (G, 1)
        sum_sl = jnp.sum(s * l, axis=1, keepdims=True)
        sum_sp = jnp.sum(s * p, axis=1, keepdims=True)
        sum_slp = jnp.sum(s * lp, axis=1, keepdims=True)

        @pl.when(t == 0)
        def _():
            s_sum_ref[...] = jnp.zeros_like(s_sum_ref)
            sl_sum_ref[...] = jnp.zeros_like(sl_sum_ref)
            sp_sum_ref[...] = jnp.zeros_like(sp_sum_ref)
            slp_sum_ref[...] = jnp.zeros_like(slp_sum_ref)

        s_sum_ref[...] += sum_s
        sl_sum_ref[...] += sum_sl
        sp_sum_ref[...] += sum_sp
        slp_sum_ref[...] += sum_slp

    return kernel


def confusion_matrix_fairness(pred, labels, sensitive, majority_minority_pairs,
                              cm_metrics, threshold=None, max_tile_n=_MAX_TILE_N):
    """pred: (N,), labels: (N,) in {0,1}, sensitive: (N, G) dummy codes.

    Returns (P,) float32, one entry per (majority, minority) pair.
    """
    pred = jnp.asarray(pred, jnp.float32).reshape(-1)
    labels = jnp.asarray(labels, jnp.float32).reshape(-1)
    sensitive = jnp.asarray(sensitive)
    n = pred.shape[0]
    g = sensitive.shape[1]

    # ---- layout plumbing: N on lanes, compressed side streams, padding ----
    c_splits = _CORE_SPLITS
    tile_n = min(max_tile_n, _round_up(max(pl.cdiv(n, c_splits), 1), 128))
    tiles_per_split = pl.cdiv(n, c_splits * tile_n)
    n_pad = c_splits * tiles_per_split * tile_n
    pad = n_pad - n

    pred_p = jnp.pad(pred, (0, pad)).reshape(1, n_pad)                       # f32
    labels_p = jnp.pad(labels.astype(jnp.int8), (0, pad)).reshape(1, n_pad)  # i8
    sens_p = jnp.pad(sensitive.astype(jnp.int8).T, ((0, 0), (0, pad)))       # (G, N_pad) i8

    def n_block_map(c, t, _k=tiles_per_split):
        return (0, c * _k + t)

    part_shape = jax.ShapeDtypeStruct((c_splits, g, 1), jnp.float32)
    part_spec = pl.BlockSpec((None, g, 1), lambda c, t: (c, 0, 0))

    bytes_accessed = int(n_pad * (g + 1) + n_pad * 4 + 4 * c_splits * g * 4)
    cost = pl.CostEstimate(flops=int(8 * n_pad * g), transcendentals=0,
                           bytes_accessed=bytes_accessed)

    sums = pl.pallas_call(
        _make_cm_sums_kernel(threshold),
        out_shape=(part_shape,) * 4,
        grid=(c_splits, tiles_per_split),
        in_specs=[
            pl.BlockSpec((1, tile_n), n_block_map),   # pred      f32
            pl.BlockSpec((1, tile_n), n_block_map),   # labels    int8
            pl.BlockSpec((g, tile_n), n_block_map),   # sensitive int8, (G, N)
        ],
        out_specs=(part_spec,) * 4,
        compiler_params=pltpu.CompilerParams(
            dimension_semantics=("parallel", "arbitrary"),
            vmem_limit_bytes=32 * 1024 * 1024),
        cost_estimate=cost,
    )(pred_p, labels_p, sens_p)

    # ---- tiny epilogue on the (4, G) totals (plain JAX, O(P * #metrics)) ----
    s_tot, sl_tot, sp_tot, slp_tot = [x.sum(axis=0)[:, 0] for x in sums]  # each (G,)
    tp = slp_tot
    fn = sl_tot - slp_tot
    fp = sp_tot - slp_tot
    tn = s_tot - sl_tot - sp_tot + slp_tot

    all_metrics = {
        'tpr': tp / (tp + fn),
        'fpr': fp / (fp + tn),
        'tnr': tn / (tn + fp),
        'fnr': fn / (fn + tp),
        'ppv': tp / (tp + fp),
        'npv': tn / (tn + fn),
        'accuracy': (tp + tn) / (tp + fp + tn + fn),
    }
    m = jnp.stack([jnp.nan_to_num(all_metrics[k], nan=0.0) for k in cm_metrics])  # (#metrics, G)

    maj_idx, min_idx = [], []
    for maj, mins in majority_minority_pairs:
        for mi in mins:
            maj_idx.append(maj)
            min_idx.append(mi)
    maj_idx = jnp.asarray(maj_idx, jnp.int32)
    min_idx = jnp.asarray(min_idx, jnp.int32)
    return jnp.mean(jnp.abs(m[:, min_idx] - m[:, maj_idx]), axis=0)   # (P,)


def _reference(pred, labels, sensitive, pairs, cm_metrics, threshold):
    """Numpy reference mirroring the PyTorch gather-then-compute semantics."""
    pred = np.asarray(pred, np.float64).reshape(-1)
    labels = np.asarray(labels, np.float64).reshape(-1)
    sens = np.asarray(sensitive, np.float64)
    if threshold is not None:
        pred = (pred >= threshold).astype(np.float64)

    def group_metrics(gi):
        mask = sens[:, gi] == 1.0
        l, p = labels[mask], pred[mask]
        tp = np.sum(l * p)
        fp = np.sum((1.0 - l) * p)
        fn = np.sum(l * (1.0 - p))
        tn = np.sum((1.0 - l) * (1.0 - p))
        with np.errstate(invalid='ignore', divide='ignore'):
            vals = {'tpr': tp / (tp + fn), 'fpr': fp / (fp + tn),
                    'tnr': tn / (tn + fp), 'fnr': fn / (fn + tp),
                    'ppv': tp / (tp + fp), 'npv': tn / (tn + fn),
                    'accuracy': (tp + tn) / (tp + fp + tn + fn)}
        v = np.array([vals[k] for k in cm_metrics], dtype=np.float64)
        return np.nan_to_num(v, nan=0.0)

    out = []
    for maj, mins in pairs:
        mm = group_metrics(maj)
        for mi in mins:
            out.append(np.mean(np.abs(group_metrics(mi) - mm)))
    return np.array(out)


if __name__ == "__main__":
    key = jax.random.PRNGKey(0)

    # --- case 1: small problem (one tile per core-split, lots of padding) ---
    n1, g1 = 96, 3
    k1, k2, k3, key = jax.random.split(key, 4)
    pred1 = jax.random.uniform(k1, (n1,), dtype=jnp.float32)
    labels1 = (jax.random.uniform(k2, (n1,)) < 0.55).astype(jnp.float32)
    groups1 = jax.random.randint(k3, (n1,), 0, g1)
    sens1 = jax.nn.one_hot(groups1, g1, dtype=jnp.float32)      # (N, G) dummy codes
    pairs1 = [(0, [1, 2])]                                      # SensitiveMap pairs
    metrics1 = ['tpr', 'fpr', 'ppv', 'accuracy']

    out1 = jax.block_until_ready(
        confusion_matrix_fairness(pred1, labels1, sens1, pairs1, metrics1, threshold=0.5))
    ref1 = _reference(pred1, labels1, sens1, pairs1, metrics1, threshold=0.5)
    np.testing.assert_allclose(np.asarray(out1), ref1, rtol=1e-5, atol=1e-5)

    # --- case 2: multi-tile accumulation + padded tail + all 7 metrics ---
    n2, g2 = 1000, 4
    k1, k2, k3, key = jax.random.split(key, 4)
    pred2 = jax.random.uniform(k1, (n2,), dtype=jnp.float32)
    labels2 = (jax.random.uniform(k2, (n2,)) < 0.4).astype(jnp.float32)
    groups2 = jax.random.randint(k3, (n2,), 0, g2)
    sens2 = jax.nn.one_hot(groups2, g2, dtype=jnp.float32)
    pairs2 = [(0, [1]), (2, [3])]
    metrics2 = list(_ALL_METRICS)

    out2 = jax.block_until_ready(
        confusion_matrix_fairness(pred2, labels2, sens2, pairs2, metrics2,
                                  threshold=0.5, max_tile_n=256))
    ref2 = _reference(pred2, labels2, sens2, pairs2, metrics2, threshold=0.5)
    np.testing.assert_allclose(np.asarray(out2), ref2, rtol=1e-5, atol=1e-5)

    print("KERNEL_OK")
</pallas_src>

<mosaic_0001>
module attributes {stable_mosaic.version = 11 : i64} {
  func.func @kernel(%arg0: i32, %arg1: i32, %arg2: memref<1x128xf32, #tpu.memory_space<vmem>>, %arg3: memref<1x128xi8, #tpu.memory_space<vmem>>, %arg4: memref<3x128xi8, #tpu.memory_space<vmem>>, %arg5: memref<1x3x1xf32, #tpu.memory_space<vmem>>, %arg6: memref<1x3x1xf32, #tpu.memory_space<vmem>>, %arg7: memref<1x3x1xf32, #tpu.memory_space<vmem>>, %arg8: memref<1x3x1xf32, #tpu.memory_space<vmem>>) attributes {dimension_semantics = [#tpu.dimension_semantics<parallel>, #tpu.dimension_semantics<arbitrary>], iteration_bounds = array<i64: 2, 1>, scalar_prefetch = 0 : i64, scratch_operands = 0 : i64, tpu.core_type = #tpu.core_type<tc>, window_params = [{transform_indices = @transform_0, window_bounds = array<i64: 1, 128>}, {transform_indices = @transform_1, window_bounds = array<i64: 1, 128>}, {transform_indices = @transform_2, window_bounds = array<i64: 3, 128>}, {transform_indices = @transform_3, window_bounds = array<i64: 1, 3, 1>}, {transform_indices = @transform_4, window_bounds = array<i64: 1, 3, 1>}, {transform_indices = @transform_5, window_bounds = array<i64: 1, 3, 1>}, {transform_indices = @transform_6, window_bounds = array<i64: 1, 3, 1>}]} {
    %c0 = arith.constant 0 : index
    %c0_0 = arith.constant 0 : index
    %0 = vector.load %arg2[%c0, %c0_0] : memref<1x128xf32, #tpu.memory_space<vmem>>, vector<1x128xf32>
    %cst = arith.constant 5.000000e-01 : f32
    %1 = vector.broadcast %cst : f32 to vector<1x128xf32>
    %2 = arith.cmpf oge, %0, %1 : vector<1x128xf32>
    %3 = arith.extui %2 : vector<1x128xi1> to vector<1x128xi32>
    %4 = arith.sitofp %3 : vector<1x128xi32> to vector<1x128xf32>
    %c0_1 = arith.constant 0 : index
    %c0_2 = arith.constant 0 : index
    %5 = vector.load %arg3[%c0_1, %c0_2] : memref<1x128xi8, #tpu.memory_space<vmem>>, vector<1x128xi8>
    %6 = arith.sitofp %5 : vector<1x128xi8> to vector<1x128xf32>
    %c0_3 = arith.constant 0 : index
    %c0_4 = arith.constant 0 : index
    %7 = vector.load %arg4[%c0_3, %c0_4] : memref<3x128xi8, #tpu.memory_space<vmem>>, vector<3x128xi8>
    %8 = arith.sitofp %7 : vector<3x128xi8> to vector<3x128xf32>
    %9 = arith.mulf %6, %4 : vector<1x128xf32>
    %cst_5 = arith.constant dense<0.000000e+00> : vector<3xf32>
    %10 = vector.multi_reduction <add>, %8, %cst_5 [1] : vector<3x128xf32> to vector<3xf32>
    %11 = vector.shape_cast %10 : vector<3xf32> to vector<3x1xf32>
    %12 = vector.broadcast %6 : vector<1x128xf32> to vector<3x128xf32>
    %13 = arith.mulf %8, %12 : vector<3x128xf32>
    %cst_6 = arith.constant dense<0.000000e+00> : vector<3xf32>
    %14 = vector.multi_reduction <add>, %13, %cst_6 [1] : vector<3x128xf32> to vector<3xf32>
    %15 = vector.shape_cast %14 : vector<3xf32> to vector<3x1xf32>
    %16 = vector.broadcast %4 : vector<1x128xf32> to vector<3x128xf32>
    %17 = arith.mulf %8, %16 : vector<3x128xf32>
    %cst_7 = arith.constant dense<0.000000e+00> : vector<3xf32>
    %18 = vector.multi_reduction <add>, %17, %cst_7 [1] : vector<3x128xf32> to vector<3xf32>
    %19 = vector.shape_cast %18 : vector<3xf32> to vector<3x1xf32>
    %20 = vector.broadcast %9 : vector<1x128xf32> to vector<3x128xf32>
    %21 = arith.mulf %8, %20 : vector<3x128xf32>
    %cst_8 = arith.constant dense<0.000000e+00> : vector<3xf32>
    %22 = vector.multi_reduction <add>, %21, %cst_8 [1] : vector<3x128xf32> to vector<3xf32>
    %23 = vector.shape_cast %22 : vector<3xf32> to vector<3x1xf32>
    %c0_i32 = arith.constant 0 : i32
    %24 = arith.cmpi eq, %arg1, %c0_i32 : i32
    %25 = arith.extui %24 : i1 to i32
    %c0_i32_9 = arith.constant 0 : i32
    %26 = arith.cmpi ne, %25, %c0_i32_9 : i32
    scf.if %26 {
      %cst_34 = arith.constant 0.000000e+00 : f32
      %51 = vector.broadcast %cst_34 : f32 to vector<3x1xf32>
      %c0_35 = arith.constant 0 : index
      %c0_36 = arith.constant 0 : index
      %c0_37 = arith.constant 0 : index
      %52 = vector.load %arg5[%c0_35, %c0_36, %c0_37] : memref<1x3x1xf32, #tpu.memory_space<vmem>>, vector<1x3x1xf32>
      %53 = vector.shape_cast %52 : vector<1x3x1xf32> to vector<3x1xf32>
      %54 = vector.shape_cast %51 : vector<3x1xf32> to vector<1x3x1xf32>
      tpu.vector_store %arg5[%c0_35, %c0_36, %c0_37], %54 {strides = array<i32>} : memref<1x3x1xf32, #tpu.memory_space<vmem>>, vector<1x3x1xf32>,
      %cst_38 = arith.constant 0.000000e+00 : f32
      %55 = vector.broadcast %cst_38 : f32 to vector<3x1xf32>
      %c0_39 = arith.constant 0 : index
      %c0_40 = arith.constant 0 : index
      %c0_41 = arith.constant 0 : index
      %56 = vector.load %arg6[%c0_39, %c0_40, %c0_41] : memref<1x3x1xf32, #tpu.memory_space<vmem>>, vector<1x3x1xf32>
      %57 = vector.shape_cast %56 : vector<1x3x1xf32> to vector<3x1xf32>
      %58 = vector.shape_cast %55 : vector<3x1xf32> to vector<1x3x1xf32>
      tpu.vector_store %arg6[%c0_39, %c0_40, %c0_41], %58 {strides = array<i32>} : memref<1x3x1xf32, #tpu.memory_space<vmem>>, vector<1x3x1xf32>,
      %cst_42 = arith.constant 0.000000e+00 : f32
      %59 = vector.broadcast %cst_42 : f32 to vector<3x1xf32>
      %c0_43 = arith.constant 0 : index
      %c0_44 = arith.constant 0 : index
      %c0_45 = arith.constant 0 : index
      %60 = vector.load %arg7[%c0_43, %c0_44, %c0_45] : memref<1x3x1xf32, #tpu.memory_space<vmem>>, vector<1x3x1xf32>
      %61 = vector.shape_cast %60 : vector<1x3x1xf32> to vector<3x1xf32>
      %62 = vector.shape_cast %59 : vector<3x1xf32> to vector<1x3x1xf32>
      tpu.vector_store %arg7[%c0_43, %c0_44, %c0_45], %62 {strides = array<i32>} : memref<1x3x1xf32, #tpu.memory_space<vmem>>, vector<1x3x1xf32>,
      %cst_46 = arith.constant 0.000000e+00 : f32
      %63 = vector.broadcast %cst_46 : f32 to vector<3x1xf32>
      %c0_47 = arith.constant 0 : index
      %c0_48 = arith.constant 0 : index
      %c0_49 = arith.constant 0 : index
      %64 = vector.load %arg8[%c0_47, %c0_48, %c0_49] : memref<1x3x1xf32, #tpu.memory_space<vmem>>, vector<1x3x1xf32>
      %65 = vector.shape_cast %64 : vector<1x3x1xf32> to vector<3x1xf32>
      %66 = vector.shape_cast %63 : vector<3x1xf32> to vector<1x3x1xf32>
      tpu.vector_store %arg8[%c0_47, %c0_48, %c0_49], %66 {strides = array<i32>} : memref<1x3x1xf32, #tpu.memory_space<vmem>>, vector<1x3x1xf32>,
    } else {
    }
    %c0_10 = arith.constant 0 : index
    %c0_11 = arith.constant 0 : index
    %c0_12 = arith.constant 0 : index
    %27 = vector.load %arg5[%c0_10, %c0_11, %c0_12] : memref<1x3x1xf32, #tpu.memory_space<vmem>>, vector<1x3x1xf32>
    %28 = vector.shape_cast %27 : vector<1x3x1xf32> to vector<3x1xf32>
    %29 = arith.addf %28, %11 : vector<3x1xf32>
    %c0_13 = arith.constant 0 : index
    %c0_14 = arith.constant 0 : index
    %c0_15 = arith.constant 0 : index
    %30 = vector.load %arg5[%c0_13, %c0_14, %c0_15] : memref<1x3x1xf32, #tpu.memory_space<vmem>>, vector<1x3x1xf32>
    %31 = vector.shape_cast %30 : vector<1x3x1xf32> to vector<3x1xf32>
    %32 = vector.shape_cast %29 : vector<3x1xf32> to vector<1x3x1xf32>
    tpu.vector_store %arg5[%c0_13, %c0_14, %c0_15], %32 {strides = array<i32>} : memref<1x3x1xf32, #tpu.memory_space<vmem>>, vector<1x3x1xf32>,
    %c0_16 = arith.constant 0 : index
    %c0_17 = arith.constant 0 : index
    %c0_18 = arith.constant 0 : index
    %33 = vector.load %arg6[%c0_16, %c0_17, %c0_18] : memref<1x3x1xf32, #tpu.memory_space<vmem>>, vector<1x3x1xf32>
    %34 = vector.shape_cast %33 : vector<1x3x1xf32> to vector<3x1xf32>
    %35 = arith.addf %34, %15 : vector<3x1xf32>
    %c0_19 = arith.constant 0 : index
    %c0_20 = arith.constant 0 : index
    %c0_21 = arith.constant 0 : index
    %36 = vector.load %arg6[%c0_19, %c0_20, %c0_21] : memref<1x3x1xf32, #tpu.memory_space<vmem>>, vector<1x3x1xf32>
    %37 = vector.shape_cast %36 : vector<1x3x1xf32> to vector<3x1xf32>
    %38 = vector.shape_cast %35 : vector<3x1xf32> to vector<1x3x1xf32>
    tpu.vector_store %arg6[%c0_19, %c0_20, %c0_21], %38 {strides = array<i32>} : memref<1x3x1xf32, #tpu.memory_space<vmem>>, vector<1x3x1xf32>,
    %c0_22 = arith.constant 0 : index
    %c0_23 = arith.constant 0 : index
    %c0_24 = arith.constant 0 : index
    %39 = vector.load %arg7[%c0_22, %c0_23, %c0_24] : memref<1x3x1xf32, #tpu.memory_space<vmem>>, vector<1x3x1xf32>
    %40 = vector.shape_cast %39 : vector<1x3x1xf32> to vector<3x1xf32>
    %41 = arith.addf %40, %19 : vector<3x1xf32>
    %c0_25 = arith.constant 0 : index
    %c0_26 = arith.constant 0 : index
    %c0_27 = arith.constant 0 : index
    %42 = vector.load %arg7[%c0_25, %c0_26, %c0_27] : memref<1x3x1xf32, #tpu.memory_space<vmem>>, vector<1x3x1xf32>
    %43 = vector.shape_cast %42 : vector<1x3x1xf32> to vector<3x1xf32>
    %44 = vector.shape_cast %41 : vector<3x1xf32> to vector<1x3x1xf32>
    tpu.vector_store %arg7[%c0_25, %c0_26, %c0_27], %44 {strides = array<i32>} : memref<1x3x1xf32, #tpu.memory_space<vmem>>, vector<1x3x1xf32>,
    %c0_28 = arith.constant 0 : index
    %c0_29 = arith.constant 0 : index
    %c0_30 = arith.constant 0 : index
    %45 = vector.load %arg8[%c0_28, %c0_29, %c0_30] : memref<1x3x1xf32, #tpu.memory_space<vmem>>, vector<1x3x1xf32>
    %46 = vector.shape_cast %45 : vector<1x3x1xf32> to vector<3x1xf32>
    %47 = arith.addf %46, %23 : vector<3x1xf32>
    %c0_31 = arith.constant 0 : index
    %c0_32 = arith.constant 0 : index
    %c0_33 = arith.constant 0 : index
    %48 = vector.load %arg8[%c0_31, %c0_32, %c0_33] : memref<1x3x1xf32, #tpu.memory_space<vmem>>, vector<1x3x1xf32>
    %49 = vector.shape_cast %48 : vector<1x3x1xf32> to vector<3x1xf32>
    %50 = vector.shape_cast %47 : vector<3x1xf32> to vector<1x3x1xf32>
    tpu.vector_store %arg8[%c0_31, %c0_32, %c0_33], %50 {strides = array<i32>} : memref<1x3x1xf32, #tpu.memory_space<vmem>>, vector<1x3x1xf32>,
    return
  }
  func.func @transform_0(%arg0: i32, %arg1: i32) -> (i32, i32) {
    %c1_i32 = arith.constant 1 : i32
    %0 = arith.muli %arg0, %c1_i32 : i32
    %1 = arith.addi %0, %arg1 : i32
    %c0_i32 = arith.constant 0 : i32
    %c0_i32_0 = arith.constant 0 : i32
    return %c0_i32, %1 : i32, i32
  }
  func.func @transform_1(%arg0: i32, %arg1: i32) -> (i32, i32) {
    %c1_i32 = arith.constant 1 : i32
    %0 = arith.muli %arg0, %c1_i32 : i32
    %1 = arith.addi %0, %arg1 : i32
    %c0_i32 = arith.constant 0 : i32
    %c0_i32_0 = arith.constant 0 : i32
    return %c0_i32, %1 : i32, i32
  }
  func.func @transform_2(%arg0: i32, %arg1: i32) -> (i32, i32) {
    %c1_i32 = arith.constant 1 : i32
    %0 = arith.muli %arg0, %c1_i32 : i32
    %1 = arith.addi %0, %arg1 : i32
    %c0_i32 = arith.constant 0 : i32
    %c0_i32_0 = arith.constant 0 : i32
    return %c0_i32, %1 : i32, i32
  }
  func.func @transform_3(%arg0: i32, %arg1: i32) -> (i32, i32, i32) {
    %c0_i32 = arith.constant 0 : i32
    %c0_i32_0 = arith.constant 0 : i32
    %c0_i32_1 = arith.constant 0 : i32
    return %arg0, %c0_i32, %c0_i32_0 : i32, i32, i32
  }
  func.func @transform_4(%arg0: i32, %arg1: i32) -> (i32, i32, i32) {
    %c0_i32 = arith.constant 0 : i32
    %c0_i32_0 = arith.constant 0 : i32
    %c0_i32_1 = arith.constant 0 : i32
    return %arg0, %c0_i32, %c0_i32_0 : i32, i32, i32
  }
  func.func @transform_5(%arg0: i32, %arg1: i32) -> (i32, i32, i32) {
    %c0_i32 = arith.constant 0 : i32
    %c0_i32_0 = arith.constant 0 : i32
    %c0_i32_1 = arith.constant 0 : i32
    return %arg0, %c0_i32, %c0_i32_0 : i32, i32, i32
  }
  func.func @transform_6(%arg0: i32, %arg1: i32) -> (i32, i32, i32) {
    %c0_i32 = arith.constant 0 : i32
    %c0_i32_0 = arith.constant 0 : i32
    %c0_i32_1 = arith.constant 0 : i32
    return %arg0, %c0_i32, %c0_i32_0 : i32, i32, i32
  }
}

</mosaic_0001>

<llo_original>
// kernel: tpu_custom_call.1
$region0: #{tpu_custom_call.1}
  #allocation0 [shape = 'u32[]', space=smem, size = 0x4, offset = 0x4, fixed_abs, tag = 'smem constant byte address 0x4 - core index']
  #allocation1 [shape = 'u32[144,128]{1,0:T(1,128)}', space=vmem, size = 0x12000, scoped, tag = 'internal scratch']
  %s0 = inlined_call_operand.hbm [shape: f32[1,256], index: 0, kind: input, shape index: {}]
  %s1 = inlined_call_operand.vmem [shape: s8[1,256], index: 1, kind: input, shape index: {}]
  %s2 = inlined_call_operand.vmem [shape: s8[3,256], index: 2, kind: input, shape index: {}]
  %s3 = inlined_call_operand.vmem [shape: f32[2,3,1], index: 3, kind: output, shape index: {0}]
  %s4 = inlined_call_operand.vmem [shape: f32[2,3,1], index: 4, kind: output, shape index: {1}]
  %s5 = inlined_call_operand.vmem [shape: f32[2,3,1], index: 5, kind: output, shape index: {2}]
  %s6 = inlined_call_operand.vmem [shape: f32[2,3,1], index: 6, kind: output, shape index: {3}]
  %7 = xla_tuple %s3, %s4, %s5, %s6
  %s8 = sld [smem:[#allocation0]]
  $region77: #{tpu_custom_call.1} parent=0
    _
  %s10 = ssub.s32 1, %s8
  %s11 = scalar_select 0, %s10, %s8
  $region1: #{tpu_custom_call.1} parent=0
    #allocation2 [shape = 'u8[1024]{0}', space=vmem, size = 0x400, scoped, tag = 'input window, operand 0']
    #allocation3 [shape = 's32[2]{0}', space=sflag, size = 0x8, scoped, tag = 'scoped memory for tpu_custom_call.1']
    %12 = vsyncpa [#allocation3], 0
    %s13 = scalar_lea.sflag [#allocation3], 1
    %14 = vsyncpa %s13, 0
    loop: start=0, step=1, limit=4
    $region2: #{tpu_custom_call.1} parent=1 // loop_pre_header
      _
    $region3: #{tpu_custom_call.1} parent=1 // loop_header
      %s16 = sphi 0, %s20
      %p17 = scmp.ge.s32.totalorder %s16, 4
      %s23 = sphi 0, %s35
      %s24 = sphi 0, %s31
      %s25 = sphi 0, %s23
      %s26 = sphi 0, %s24
      %s27 = sphi 0, %s25
      %s28 = sphi 0, %s26
      %s40 = sphi 0, %s42
      %s43 = sphi 0, %s40
      %s44 = sphi 0, %s43
      %s60 = sphi 0, %s44
      %s68 = sphi 0, %s70
      %s71 = sphi 0, %s68
      %s72 = sphi 0, %s71
      %s88 = sphi 0, %s72
      %s96 = sphi 0, %s98
      %s99 = sphi 0, %s96
      %s100 = sphi 0, %s99
      %s116 = sphi 0, %s100
      %s122 = sphi 0, %s124
      %s125 = sphi 0, %s122
      %s126 = sphi 0, %s125
      %s142 = sphi 0, %s126
      %s148 = sphi 0, %s150
      %s151 = sphi 0, %s148
      %s152 = sphi 0, %s151
      %s168 = sphi 0, %s152
      %s174 = sphi 0, %s176
      %s177 = sphi 0, %s174
      %s178 = sphi 0, %s177
      %s194 = sphi 0, %s178
      %s200 = sphi 0, %s202
      %s203 = sphi 0, %s200
      %s204 = sphi 0, %s203
      %s220 = sphi 0, %s204
    $region4: #{tpu_custom_call.1} parent=1 // loop_header_branch
      %19 = sbr.rel (%p17) target = $region8
    $region5: #{tpu_custom_call.1} parent=1 // loop_body
      %s21 = ssub.s32 %s16, 1
      %s22 = ssub.s32 %s16, 2
      %s29 = sadd.s32 1, %s24
      %p30 = scmp.ge.s32.totalorder %s29, 1
      %s31 = scalar_select %p30, 0, %s29
      %s32 = sadd.s32 1, %s23
      %s33 = scalar_select %p30, %s32, %s23
      %p34 = scmp.ge.s32.totalorder %s33, 2
      %s35 = scalar_select %p34, 0, %s33
      %s36 = sadd.s32 %s23, %s24
      %s37 = sadd.s32 %s35, %s31
      %s38 = ssub.s32 %s36, %s37
      %p39 = scmp.eq.s32.totalorder %s38, 0
      %s41 = sadd.s32 %s40, 1
      %s42 = scalar_select %p39, %s40, %s41
      %p45 = pneg %p39
      %p46 = scmp.eq.s32.totalorder %s16, 1
      %p47 = por %p45, %p46
      %p48 = scmp.ne.s32.totalorder %s40, %s43
      %p49 = scmp.eq.s32.totalorder %s16, 0
      %p50 = por %p48, %p49
      %p51 = scmp.ne.s32.totalorder %s40, %s43
      %p52 = scmp.eq.s32.totalorder %s21, 1
      %p53 = por %p51, %p52
      %p54 = scmp.ne.s32.totalorder %s43, %s44
      %p55 = scmp.eq.s32.totalorder %s21, 0
      %p56 = por %p54, %p55
      %p57 = scmp.ne.s32.totalorder %s43, %s44
      %p58 = scmp.eq.s32.totalorder %s22, 1
      %p59 = por %p57, %p58
      %p61 = scmp.ne.s32.totalorder %s44, %s60
      %p62 = scmp.eq.s32.totalorder %s22, 0
      %p63 = por %p61, %p62
      %s64 = sadd.s32 %s23, %s24
      %s65 = sadd.s32 %s35, %s31
      %s66 = ssub.s32 %s64, %s65
      %p67 = scmp.eq.s32.totalorder %s66, 0
      %s69 = sadd.s32 %s68, 1
      %s70 = scalar_select %p67, %s68, %s69
      %p73 = pneg %p67
      %p74 = scmp.eq.s32.totalorder %s16, 1
      %p75 = por %p73, %p74
      %p76 = scmp.ne.s32.totalorder %s68, %s71
      %p77 = scmp.eq.s32.totalorder %s16, 0
      %p78 = por %p76, %p77
      %p79 = scmp.ne.s32.totalorder %s68, %s71
      %p80 = scmp.eq.s32.totalorder %s21, 1
      %p81 = por %p79, %p80
      %p82 = scmp.ne.s32.totalorder %s71, %s72
      %p83 = scmp.eq.s32.totalorder %s21, 0
      %p84 = por %p82, %p83
      %p85 = scmp.ne.s32.totalorder %s71, %s72
      %p86 = scmp.eq.s32.totalorder %s22, 1
      %p87 = por %p85, %p86
      %p89 = scmp.ne.s32.totalorder %s72, %s88
      %p90 = scmp.eq.s32.totalorder %s22, 0
      %p91 = por %p89, %p90
      %s92 = sadd.s32 %s23, %s24
      %s93 = sadd.s32 %s35, %s31
      %s94 = ssub.s32 %s92, %s93
      %p95 = scmp.eq.s32.totalorder %s94, 0
      %s97 = sadd.s32 %s96, 1
      %s98 = scalar_select %p95, %s96, %s97
      %p101 = pneg %p95
      %p102 = scmp.eq.s32.totalorder %s16, 1
      %p103 = por %p101, %p102
      %p104 = scmp.ne.s32.totalorder %s96, %s99
      %p105 = scmp.eq.s32.totalorder %s16, 0
      %p106 = por %p104, %p105
      %p107 = scmp.ne.s32.totalorder %s96, %s99
      %p108 = scmp.eq.s32.totalorder %s21, 1
      %p109 = por %p107, %p108
      %p110 = scmp.ne.s32.totalorder %s99, %s100
      %p111 = scmp.eq.s32.totalorder %s21, 0
      %p112 = por %p110, %p111
      %p113 = scmp.ne.s32.totalorder %s99, %s100
      %p114 = scmp.eq.s32.totalorder %s22, 1
      %p115 = por %p113, %p114
      %p117 = scmp.ne.s32.totalorder %s100, %s116
      %p118 = scmp.eq.s32.totalorder %s22, 0
      %p119 = por %p117, %p118
      %s120 = ssub.s32 %s23, %s35
      %p121 = scmp.eq.s32.totalorder %s120, 0
      %s123 = sadd.s32 %s122, 1
      %s124 = scalar_select %p121, %s122, %s123
      %p127 = pneg %p121
      %p128 = scmp.eq.s32.totalorder %s16, 1
      %p129 = por %p127, %p128
      %p130 = scmp.ne.s32.totalorder %s122, %s125
      %p131 = scmp.eq.s32.totalorder %s16, 0
      %p132 = por %p130, %p131
      %p133 = scmp.ne.s32.totalorder %s122, %s125
      %p134 = scmp.eq.s32.totalorder %s21, 1
      %p135 = por %p133, %p134
      %p136 = scmp.ne.s32.totalorder %s125, %s126
      %p137 = scmp.eq.s32.totalorder %s21, 0
      %p138 = por %p136, %p137
      %p139 = scmp.ne.s32.totalorder %s125, %s126
      %p140 = scmp.eq.s32.totalorder %s22, 1
      %p141 = por %p139, %p140
      %p143 = scmp.ne.s32.totalorder %s126, %s142
      %p144 = scmp.eq.s32.totalorder %s22, 0
      %p145 = por %p143, %p144
      %s146 = ssub.s32 %s23, %s35
      %p147 = scmp.eq.s32.totalorder %s146, 0
      %s149 = sadd.s32 %s148, 1
      %s150 = scalar_select %p147, %s148, %s149
      %p153 = pneg %p147
      %p154 = scmp.eq.s32.totalorder %s16, 1
      %p155 = por %p153, %p154
      %p156 = scmp.ne.s32.totalorder %s148, %s151
      %p157 = scmp.eq.s32.totalorder %s16, 0
      %p158 = por %p156, %p157
      %p159 = scmp.ne.s32.totalorder %s148, %s151
      %p160 = scmp.eq.s32.totalorder %s21, 1
      %p161 = por %p159, %p160
      %p162 = scmp.ne.s32.totalorder %s151, %s152
      %p163 = scmp.eq.s32.totalorder %s21, 0
      %p164 = por %p162, %p163
      %p165 = scmp.ne.s32.totalorder %s151, %s152
      %p166 = scmp.eq.s32.totalorder %s22, 1
      %p167 = por %p165, %p166
      %p169 = scmp.ne.s32.totalorder %s152, %s168
      %p170 = scmp.eq.s32.totalorder %s22, 0
      %p171 = por %p169, %p170
      %s172 = ssub.s32 %s23, %s35
      %p173 = scmp.eq.s32.totalorder %s172, 0
      %s175 = sadd.s32 %s174, 1
      %s176 = scalar_select %p173, %s174, %s175
      %p179 = pneg %p173
      %p180 = scmp.eq.s32.totalorder %s16, 1
      %p181 = por %p179, %p180
      %p182 = scmp.ne.s32.totalorder %s174, %s177
      %p183 = scmp.eq.s32.totalorder %s16, 0
      %p184 = por %p182, %p183
      %p185 = scmp.ne.s32.totalorder %s174, %s177
      %p186 = scmp.eq.s32.totalorder %s21, 1
      %p187 = por %p185, %p186
      %p188 = scmp.ne.s32.totalorder %s177, %s178
      %p189 = scmp.eq.s32.totalorder %s21, 0
      %p190 = por %p188, %p189
      %p191 = scmp.ne.s32.totalorder %s177, %s178
      %p192 = scmp.eq.s32.totalorder %s22, 1
      %p193 = por %p191, %p192
      %p195 = scmp.ne.s32.totalorder %s178, %s194
      %p196 = scmp.eq.s32.totalorder %s22, 0
      %p197 = por %p195, %p196
      %s198 = ssub.s32 %s23, %s35
      %p199 = scmp.eq.s32.totalorder %s198, 0
      %s201 = sadd.s32 %s200, 1
      %s202 = scalar_select %p199, %s200, %s201
      %p205 = pneg %p199
      %p206 = scmp.eq.s32.totalorder %s16, 1
      %p207 = por %p205, %p206
      %p208 = scmp.ne.s32.totalorder %s200, %s203
      %p209 = scmp.eq.s32.totalorder %s16, 0
      %p210 = por %p208, %p209
      %p211 = scmp.ne.s32.totalorder %s200, %s203
      %p212 = scmp.eq.s32.totalorder %s21, 1
      %p213 = por %p211, %p212
      %p214 = scmp.ne.s32.totalorder %s203, %s204
      %p215 = scmp.eq.s32.totalorder %s21, 0
      %p216 = por %p214, %p215
      %p217 = scmp.ne.s32.totalorder %s203, %s204
      %p218 = scmp.eq.s32.totalorder %s22, 1
      %p219 = por %p217, %p218
      %p221 = scmp.ne.s32.totalorder %s204, %s220
      %p222 = scmp.eq.s32.totalorder %s22, 0
      %p223 = por %p221, %p222
      %p224 = scmp.le.s32.totalorder 1, %s16
      %p225 = scmp.lt.s32.totalorder %s16, 3
      %p226 = pnand %p224, %p225
      %p227 = pneg %p226
      // Predicated region
      $region9: #{tpu_custom_call.1} parent=5 // pred_check
        _
      $region10: #{tpu_custom_call.1} parent=5 // pred_check_branch
        %229 = sbr.rel (%p226) target = $region12
      $region11: #{tpu_custom_call.1} parent=5 // pred_region
        %s230 = ssub.s32 %s16, 1
      $region12: #{tpu_custom_call.1} parent=5 // pred_fallthru
        _
      %p231 = scmp.lt.s32.totalorder %s16, 2
      // Predicated region
      $region13: #{tpu_custom_call.1} parent=5 // pred_check
        %p232 = pneg %p231
      $region14: #{tpu_custom_call.1} parent=5 // pred_check_branch
        %234 = sbr.rel (%p232) target = $region16
      $region15: #{tpu_custom_call.1} parent=5 // pred_region
        // Predicated region
        $region17: #{tpu_custom_call.1} parent=15 // pred_check
          %p235 = pneg %p50
        $region18: #{tpu_custom_call.1} parent=15 // pred_check_branch
          %237 = sbr.rel (%p235) target = $region20
        $region19: #{tpu_custom_call.1} parent=15 // pred_region
          %s238 = sand.u32 %s40, 1
          %s239 = scalar_lea.sflag [#allocation3], %s238
          %s240 = sand.u32 %s40, 1
          %s241 = scalar_lea.vmem [#allocation2], %s240
          %s242 = sadd.s32 %s23, %s24
          %s244 = ssub.s32 16, 16
          %245 = vsyncadd %s239, %s244
          %s246 = smul.addr %s242, 16
          %s247 = scalar_lea.hbm %s0, %s246
          %s249 = sshll.u32 %s241, 4
          %s250 = int_to_ptr.vmem [resolvable:$true] %s249
          %252 = dma.hbm_to_vmem [thread:$0]  %s247, 16, %s250, %s239
        $region20: #{tpu_custom_call.1} parent=15 // pred_fallthru
          _
        // Predicated region
        $region21: #{tpu_custom_call.1} parent=15 // pred_check
          %p253 = pneg %p78
        $region22: #{tpu_custom_call.1} parent=15 // pred_check_branch
          %255 = sbr.rel (%p253) target = $region24
        $region23: #{tpu_custom_call.1} parent=15 // pred_region
          %s256 = sadd.s32 %s23, %s24
          %p257 = scmp.lt.s32.totalorder %s256, 1
          %s258 = scalar_select %p257, %s256, 1
          %s259 = scalar_lea.vmem %s1, %s258
          %s260 = sadd.s32 %s23, %s24
        $region24: #{tpu_custom_call.1} parent=15 // pred_fallthru
          _
        // Predicated region
        $region25: #{tpu_custom_call.1} parent=15 // pred_check
          %p261 = pneg %p106
        $region26: #{tpu_custom_call.1} parent=15 // pred_check_branch
          %263 = sbr.rel (%p261) target = $region28
        $region27: #{tpu_custom_call.1} parent=15 // pred_region
          %s264 = sadd.s32 %s23, %s24
          %p265 = scmp.lt.s32.totalorder %s264, 1
          %s266 = scalar_select %p265, %s264, 1
          %s267 = scalar_lea.vmem %s2, %s266
          %s268 = sadd.s32 %s23, %s24
        $region28: #{tpu_custom_call.1} parent=15 // pred_fallthru
          _
      $region16: #{tpu_custom_call.1} parent=5 // pred_fallthru
        _
      %p269 = scmp.le.s32.totalorder 1, %s16
      %p270 = scmp.lt.s32.totalorder %s16, 3
      %p271 = pnand %p269, %p270
      %p272 = pneg %p271
      // Predicated region
      $region29: #{tpu_custom_call.1} parent=5 // pred_check
        _
      $region30: #{tpu_custom_call.1} parent=5 // pred_check_branch
        %274 = sbr.rel (%p271) target = $region32
      $region31: #{tpu_custom_call.1} parent=5 // pred_region
        %s275 = ssub.s32 %s16, 1
        %s276 = sand.u32 %s43, 1
        %s277 = scalar_lea.sflag [#allocation3], %s276
        %s278 = sand.u32 %s43, 1
        %s279 = scalar_lea.vmem [#allocation2], %s278
        // Predicated region
        $region33: #{tpu_custom_call.1} parent=31 // pred_check
          %p280 = pneg %p56
        $region34: #{tpu_custom_call.1} parent=31 // pred_check_branch
          %282 = sbr.rel (%p280) target = $region36
        $region35: #{tpu_custom_call.1} parent=31 // pred_region
          %283 = dma.done %s277, 16
        $region36: #{tpu_custom_call.1} parent=31 // pred_fallthru
          _
        %s284 = sand.u32 %s43, 1
        %s285 = scalar_lea.sflag [#allocation3], %s284
        %s286 = sand.u32 %s43, 1
        %s287 = scalar_lea.vmem [#allocation2], %s286
        %p288 = pneg %p56
        %p289 = pneg %p53
        %s290 = sadd.s32 %s25, %s26
        %p291 = scmp.lt.s32.totalorder %s290, 1
        %s292 = scalar_select %p291, %s290, 1
        %s293 = scalar_lea.vmem %s1, %s292
        %p294 = pneg %p84
        %p295 = pneg %p81
        %s296 = sadd.s32 %s25, %s26
        %p297 = scmp.lt.s32.totalorder %s296, 1
        %s298 = scalar_select %p297, %s296, 1
        %s299 = scalar_lea.vmem %s2, %s298
        %p300 = pneg %p112
        %p301 = pneg %p109
        %p302 = pneg %p138
        %p303 = pneg %p135
        %p304 = scmp.lt.s32.totalorder %s25, 1
        %s305 = scalar_select %p304, %s25, 1
        %s306 = smul.addr %s305, 4
        %s307 = scalar_lea.vmem %s3, %s306
        %p308 = pneg %p164
        %p309 = pneg %p161
        %p310 = scmp.lt.s32.totalorder %s25, 1
        %s311 = scalar_select %p310, %s25, 1
        %s312 = smul.addr %s311, 4
        %s313 = scalar_lea.vmem %s4, %s312
        %p314 = pneg %p190
        %p315 = pneg %p187
        %p316 = scmp.lt.s32.totalorder %s25, 1
        %s317 = scalar_select %p316, %s25, 1
        %s318 = smul.addr %s317, 4
        %s319 = scalar_lea.vmem %s5, %s318
        %p320 = pneg %p216
        %p321 = pneg %p213
        %p322 = scmp.lt.s32.totalorder %s25, 1
        %s323 = scalar_select %p322, %s25, 1
        %s324 = smul.addr %s323, 4
        %s325 = scalar_lea.vmem %s6, %s324
        %s326 = sadd.s32 %s25, %s26
        %s327 = sadd.s32 %s25, %s26
        %p328 = scmp.lt.s32.totalorder %s327, 1
        %s329 = scalar_select %p328, %s327, 1
        %s330 = scalar_lea.vmem %s1, %s329
        %s331 = sadd.s32 %s25, %s26
        %s332 = sadd.s32 %s25, %s26
        %p333 = scmp.lt.s32.totalorder %s332, 1
        %s334 = scalar_select %p333, %s332, 1
        %s335 = scalar_lea.vmem %s2, %s334
        %s336 = sadd.s32 %s25, %s26
        %p337 = scmp.lt.s32.totalorder %s25, 1
        %s338 = scalar_select %p337, %s25, 1
        %s339 = smul.addr %s338, 4
        %s340 = scalar_lea.vmem %s3, %s339
        %p341 = scmp.lt.s32.totalorder %s25, 1
        %s342 = scalar_select %p341, %s25, 1
        %s343 = smul.addr %s342, 4
        %s344 = scalar_lea.vmem %s4, %s343
        %p345 = scmp.lt.s32.totalorder %s25, 1
        %s346 = scalar_select %p345, %s25, 1
        %s347 = smul.addr %s346, 4
        %s348 = scalar_lea.vmem %s5, %s347
        %p349 = scmp.lt.s32.totalorder %s25, 1
        %s350 = scalar_select %p349, %s25, 1
        %s351 = smul.addr %s350, 4
        %s352 = scalar_lea.vmem %s6, %s351
        %v353 = vld [vmem:[%s279] sm:$0x1]
        %vm354 = vcmp.ge.f32.partialorder %v353, 0.5
        %v355 = vsel %vm354, 1, 0
        %v356 = vcvt.s32.f32 %v355
        %v357 = vld [vmem:[%s330] sm:$0x1]
        %v358 = vunpack.c.0.s8 %v357
        %v359 = vcvt.s32.f32 %v358
        %v360 = vld [vmem:[%s335] sm:$0x1]
        %v361 = vunpack.c.0.s8 %v360
        %v362 = vcvt.s32.f32 %v361
        %v363 = vmul.f32 %v359, %v356
        %vm364 = vcmask 1042432
        %v365 = vsel %vm364, %v362, 0.0
        %366 = vadd.xlane.f32.xlu0 %v365
        %v367 = vpop.xlane.xlu0 %366
        %v368 = vlaneseq
        %v369 = vshrl.u32 %v368, 7
        %v370 = vsub.s32 0, %v369
        %v371 = vrot.slane %v359, %v370
        %v372 = vmul.f32 %v362, %v371
        %v373 = vsel %vm364, %v372, 0.0
        %374 = vadd.xlane.f32.xlu0 %v373
        %v375 = vpop.xlane.xlu0 %374
        %v377 = vlaneseq
        %v378 = vshrl.u32 %v377, 7
        %v379 = vsub.s32 0, %v378
        %v380 = vrot.slane %v356, %v379
        %v382 = vmul.f32 %v362, %v380
        %v383 = vsel %vm364, %v382, 0.0
        %384 = vadd.xlane.f32.xlu0 %v383
        %v385 = vpop.xlane.xlu0 %384
        %v386 = vlaneseq
        %v387 = vshrl.u32 %v386, 7
        %v388 = vsub.s32 0, %v387
        %v389 = vrot.slane %v363, %v388
        %v390 = vmul.f32 %v362, %v389
        %v391 = vsel %vm364, %v390, 0.0
        %392 = vadd.xlane.f32.xlu0 %v391
        %v393 = vpop.xlane.xlu0 %392
        %p394 = scmp.eq.s32.totalorder %s26, 0
        // Predicated region
        $region37: #{tpu_custom_call.1} parent=31 // pred_check
          %p395 = pneg %p394
        $region38: #{tpu_custom_call.1} parent=31 // pred_check_branch
          %397 = sbr.rel (%p395) target = $region40
        $region39: #{tpu_custom_call.1} parent=31 // pred_region
          %vm398 = vcmask 2048
          %399 = vst.msk [vmem:[%s340] sm:$0x7] %vm398, 0.0
          %400 = vst.msk [vmem:[%s344] sm:$0x7] %vm398, 0.0
          %401 = vst.msk [vmem:[%s348] sm:$0x7] %vm398, 0.0
          %402 = vst.msk [vmem:[%s352] sm:$0x7] %vm398, 0.0
        $region40: #{tpu_custom_call.1} parent=31 // pred_fallthru
          _
        %v403 = vld [vmem:[%s340] sm:$0x7]
        %v404 = vadd.f32 %v403, %v367
        %vm405 = vcmask 2048
        %406 = vst.msk [vmem:[%s340] sm:$0x7] %vm405, %v404
        %v407 = vld [vmem:[%s344] sm:$0x7]
        %v408 = vadd.f32 %v407, %v375
        %409 = vst.msk [vmem:[%s344] sm:$0x7] %vm405, %v408
        %v410 = vld [vmem:[%s348] sm:$0x7]
        %v411 = vadd.f32 %v410, %v385
        %412 = vst.msk [vmem:[%s348] sm:$0x7] %vm405, %v411
        %v413 = vld [vmem:[%s352] sm:$0x7]
        %v414 = vadd.f32 %v413, %v393
        %415 = vst.msk [vmem:[%s352] sm:$0x7] %vm405, %v414
        %p416 = scmp.lt.s32.totalorder %s25, 1
        %s417 = scalar_select %p416, %s25, 1
        %s418 = smul.addr %s417, 4
        %s419 = scalar_lea.vmem %s3, %s418
        %p420 = scmp.lt.s32.totalorder %s25, 1
        %s421 = scalar_select %p420, %s25, 1
        %s422 = smul.addr %s421, 4
        %s423 = scalar_lea.vmem %s4, %s422
        %p424 = scmp.lt.s32.totalorder %s25, 1
        %s425 = scalar_select %p424, %s25, 1
        %s426 = smul.addr %s425, 4
        %s427 = scalar_lea.vmem %s5, %s426
        %p428 = scmp.lt.s32.totalorder %s25, 1
        %s429 = scalar_select %p428, %s25, 1
        %s430 = smul.addr %s429, 4
        %s431 = scalar_lea.vmem %s6, %s430
        // Predicated region
        $region41: #{tpu_custom_call.1} parent=31 // pred_check
          %p432 = pneg %p135
        $region42: #{tpu_custom_call.1} parent=31 // pred_check_branch
          %434 = sbr.rel (%p432) target = $region44
        $region43: #{tpu_custom_call.1} parent=31 // pred_region
          _
        $region44: #{tpu_custom_call.1} parent=31 // pred_fallthru
          _
        // Predicated region
        $region45: #{tpu_custom_call.1} parent=31 // pred_check
          %p435 = pneg %p161
        $region46: #{tpu_custom_call.1} parent=31 // pred_check_branch
          %437 = sbr.rel (%p435) target = $region48
        $region47: #{tpu_custom_call.1} parent=31 // pred_region
          _
        $region48: #{tpu_custom_call.1} parent=31 // pred_fallthru
          _
        // Predicated region
        $region49: #{tpu_custom_call.1} parent=31 // pred_check
          %p438 = pneg %p187
        $region50: #{tpu_custom_call.1} parent=31 // pred_check_branch
          %440 = sbr.rel (%p438) target = $region52
        $region51: #{tpu_custom_call.1} parent=31 // pred_region
          _
        $region52: #{tpu_custom_call.1} parent=31 // pred_fallthru
          _
        // Predicated region
        $region53: #{tpu_custom_call.1} parent=31 // pred_check
          %p441 = pneg %p213
        $region54: #{tpu_custom_call.1} parent=31 // pred_check_branch
          %443 = sbr.rel (%p441) target = $region56
        $region55: #{tpu_custom_call.1} parent=31 // pred_region
          _
        $region56: #{tpu_custom_call.1} parent=31 // pred_fallthru
          _
      $region32: #{tpu_custom_call.1} parent=5 // pred_fallthru
        _
      %p444 = scmp.le.s32.totalorder 2, %s16
      // Predicated region
      $region57: #{tpu_custom_call.1} parent=5 // pred_check
        %p445 = pneg %p444
      $region58: #{tpu_custom_call.1} parent=5 // pred_check_branch
        %447 = sbr.rel (%p445) target = $region60
      $region59: #{tpu_custom_call.1} parent=5 // pred_region
        %s448 = ssub.s32 %s16, 2
        // Predicated region
        $region61: #{tpu_custom_call.1} parent=59 // pred_check
          %p449 = pneg %p141
        $region62: #{tpu_custom_call.1} parent=59 // pred_check_branch
          %451 = sbr.rel (%p449) target = $region64
        $region63: #{tpu_custom_call.1} parent=59 // pred_region
          %p452 = scmp.lt.s32.totalorder %s27, 1
          %s453 = scalar_select %p452, %s27, 1
          %s454 = smul.addr %s453, 4
          %s455 = scalar_lea.vmem %s3, %s454
        $region64: #{tpu_custom_call.1} parent=59 // pred_fallthru
          _
        // Predicated region
        $region65: #{tpu_custom_call.1} parent=59 // pred_check
          %p456 = pneg %p167
        $region66: #{tpu_custom_call.1} parent=59 // pred_check_branch
          %458 = sbr.rel (%p456) target = $region68
        $region67: #{tpu_custom_call.1} parent=59 // pred_region
          %p459 = scmp.lt.s32.totalorder %s27, 1
          %s460 = scalar_select %p459, %s27, 1
          %s461 = smul.addr %s460, 4
          %s462 = scalar_lea.vmem %s4, %s461
        $region68: #{tpu_custom_call.1} parent=59 // pred_fallthru
          _
        // Predicated region
        $region69: #{tpu_custom_call.1} parent=59 // pred_check
          %p463 = pneg %p193
        $region70: #{tpu_custom_call.1} parent=59 // pred_check_branch
          %465 = sbr.rel (%p463) target = $region72
        $region71: #{tpu_custom_call.1} parent=59 // pred_region
          %p466 = scmp.lt.s32.totalorder %s27, 1
          %s467 = scalar_select %p466, %s27, 1
          %s468 = smul.addr %s467, 4
          %s469 = scalar_lea.vmem %s5, %s468
        $region72: #{tpu_custom_call.1} parent=59 // pred_fallthru
          _
        // Predicated region
        $region73: #{tpu_custom_call.1} parent=59 // pred_check
          %p470 = pneg %p219
        $region74: #{tpu_custom_call.1} parent=59 // pred_check_branch
          %472 = sbr.rel (%p470) target = $region76
        $region75: #{tpu_custom_call.1} parent=59 // pred_region
          %p473 = scmp.lt.s32.totalorder %s27, 1
          %s474 = scalar_select %p473, %s27, 1
          %s475 = smul.addr %s474, 4
          %s476 = scalar_lea.vmem %s6, %s475
        $region76: #{tpu_custom_call.1} parent=59 // pred_fallthru
          _
      $region60: #{tpu_custom_call.1} parent=5 // pred_fallthru
        _
    $region6: #{tpu_custom_call.1} parent=1 // loop_footer
      %s20 = sadd.s32 1, %s16
    $region7: #{tpu_custom_call.1} parent=1 // loop_footer_branch
      %15 = sbr.rel target = $region3
    $region8: #{tpu_custom_call.1} parent=1 // loop_exit
      _
    %477 = vsyncpa [#allocation3], 1
    %s478 = scalar_lea.sflag [#allocation3], 1
    %479 = vsyncpa %s478, 1

</llo_original>
